<compile_context>
chip_gen: v5e
topology: v5e:2x2
jax: 0.10.0
libtpu: 0.0.40
codegen_flags: <defaults>
</compile_context>

<pallas_src>
import functools
import math

import jax
import jax.numpy as jnp
from jax import lax
from jax.experimental import pallas as pl
from jax.experimental.pallas import tpu as pltpu

LANES = 128
MAX_ROW_TILE = 1024              # (1024, 128) f32 block = 512 KiB / input / buffer
SMALL_INPUT_ELEMENTS = 1 << 20   # below this, a fused XLA reduction is faster


def _round_up(x, m):
    return ((x + m - 1) // m) * m


def _dice_sums_kernel(x_ref, t_ref, acc_ref, *, row_tile, total_rows, need_mask):
    """Accumulate per-(sublane, lane) partial sums of x*t, x, t into acc_ref.

    acc_ref is a (3, 8, LANES) f32 block resident across the whole grid
    (accumulator pattern): slot 0 = sum(x*t), 1 = sum(x), 2 = sum(t).
    """
    i = pl.program_id(0)

    @pl.when(i == 0)
    def _():
        acc_ref[...] = jnp.zeros_like(acc_ref)

    x = x_ref[...].astype(jnp.float32)
    t = t_ref[...].astype(jnp.float32)

    if need_mask:
        # Rows past `total_rows` only occur in the tail tile and hold garbage
        # (OOB block reads are unspecified); zero them before reducing.
        rows = i * row_tile + lax.broadcasted_iota(jnp.int32, (row_tile, LANES), 0)
        valid = rows < total_rows
        x = jnp.where(valid, x, 0.0)
        t = jnp.where(valid, t, 0.0)

    # (row_tile, 128) -> (row_tile//8, 8, 128): split along whole (8,128) vreg
    # tiles, then reduce the vreg-major axis with plain VPU adds, keeping the
    # XLU out of the inner loop.
    xs = x.reshape(row_tile // 8, 8, LANES)
    ts = t.reshape(row_tile // 8, 8, LANES)
    acc_ref[0, :, :] += jnp.sum(xs * ts, axis=0)
    acc_ref[1, :, :] += jnp.sum(xs, axis=0)
    acc_ref[2, :, :] += jnp.sum(ts, axis=0)


def _as_rows_of_lanes(a):
    """Flatten to 1-D (free) and view as (M, LANES), preserving dtype.

    Only pads (a full-copy XLA op) when numel is not a multiple of 128.
    """
    flat = a.reshape(-1)
    n = flat.shape[0]
    if n % LANES != 0:
        # TODO(synk): this pad materializes a copy; only hit when numel % 128 != 0.
        flat = jnp.pad(flat, (0, _round_up(n, LANES) - n))
    return flat.reshape(-1, LANES)


def _dice_sums_pallas(x2d, t2d, row_tile=None):
    m = x2d.shape[0]
    if row_tile is None:
        row_tile = MAX_ROW_TILE if m >= MAX_ROW_TILE else _round_up(m, 16)
    row_tile = max(16, _round_up(row_tile, 16))   # multiple of 16: safe for f32/bf16
    grid = (pl.cdiv(m, row_tile),)
    need_mask = (m % row_tile) != 0

    kernel = functools.partial(
        _dice_sums_kernel, row_tile=row_tile, total_rows=m, need_mask=need_mask)

    tile_spec = pl.BlockSpec((row_tile, LANES), lambda i: (i, 0))
    acc_spec = pl.BlockSpec((3, 8, LANES), lambda i: (0, 0, 0))

    partials = pl.pallas_call(
        kernel,
        out_shape=jax.ShapeDtypeStruct((3, 8, LANES), jnp.float32),
        grid_spec=pltpu.PrefetchScalarGridSpec(
            num_scalar_prefetch=0,
            grid=grid,
            in_specs=[tile_spec, tile_spec],
            out_specs=acc_spec,
        ),
        compiler_params=pltpu.CompilerParams(
            # The accumulator output is carried across the single grid axis.
            dimension_semantics=("arbitrary",)),
    )(x2d, t2d)
    # TODO(synk): on v7x the sweep could additionally be sharded across the 2
    # TensorCores (leading CORE_PARALLEL axis + per-core accumulator slot).

    inter = jnp.sum(partials[0])
    xsum = jnp.sum(partials[1])
    tsum = jnp.sum(partials[2])
    return inter, xsum, tsum


def dice_loss(inp, target, smooth=0.001, *,
              min_pallas_elements=SMALL_INPUT_ELEMENTS, row_tile=None):
    """1 - dice(inp, target). inp/target: same shape, any rank (e.g. NCHW)."""
    n = math.prod(inp.shape)
    if n < min_pallas_elements:
        # Small-input fallback: kernel launch/pipeline prologue would dominate.
        iflat = inp.reshape(-1).astype(jnp.float32)
        tflat = target.reshape(-1).astype(jnp.float32)
        inter = jnp.sum(iflat * tflat)
        xsum = jnp.sum(iflat)
        tsum = jnp.sum(tflat)
    else:
        x2d = _as_rows_of_lanes(inp)      # keeps input dtype (bf16 stays bf16)
        t2d = _as_rows_of_lanes(target)
        inter, xsum, tsum = _dice_sums_pallas(x2d, t2d, row_tile=row_tile)

    smooth = jnp.float32(smooth)
    dice = (2.0 * inter + smooth) / (xsum + tsum + smooth)
    return (1.0 - dice).astype(jnp.float32)


def _reference_dice_loss(inp, target, smooth=0.001):
    iflat = inp.reshape(-1).astype(jnp.float32)
    tflat = target.reshape(-1).astype(jnp.float32)
    inter = jnp.sum(iflat * tflat)
    return 1.0 - (2.0 * inter + smooth) / (jnp.sum(iflat) + jnp.sum(tflat) + smooth)


if __name__ == "__main__":
    key = jax.random.PRNGKey(0)
    k1, k2, k3, k4 = jax.random.split(key, 4)

    # Case 1: NCHW like PyTorch — sigmoid probabilities vs. binary mask.
    # Force the Pallas path (the small-input fallback would otherwise kick in).
    shape = (2, 4, 16, 16)
    x = jax.nn.sigmoid(jax.random.normal(k1, shape, dtype=jnp.float32))
    t = jax.random.bernoulli(k2, p=0.5, shape=shape).astype(jnp.float32)
    loss = jax.block_until_ready(dice_loss(x, t, min_pallas_elements=0))
    ref = jax.block_until_ready(_reference_dice_loss(x, t))
    assert jnp.allclose(loss, ref, atol=1e-5, rtol=1e-5), (loss, ref)

    # Case 1b: same inputs through the small-input fallback path.
    loss_fb = jax.block_until_ready(dice_loss(x, t))
    assert jnp.allclose(loss_fb, ref, atol=1e-5, rtol=1e-5), (loss_fb, ref)

    # Case 2: ragged shape (numel % 128 != 0, rows % tile != 0) exercising the
    # lane pad + in-kernel tail-row masking + a multi-step accumulator.
    shape2 = (2, 3, 37, 53)
    x2 = jax.nn.sigmoid(jax.random.normal(k3, shape2, dtype=jnp.float32))
    t2 = jax.random.bernoulli(k4, p=0.3, shape=shape2).astype(jnp.float32)
    loss2 = jax.block_until_ready(
        dice_loss(x2, t2, min_pallas_elements=0, row_tile=32))
    ref2 = jax.block_until_ready(_reference_dice_loss(x2, t2))
    assert jnp.allclose(loss2, ref2, atol=1e-5, rtol=1e-5), (loss2, ref2)

    # Case 3: bf16 inputs stay bf16 through the BlockSpec (upcast in-kernel).
    xb = x2.astype(jnp.bfloat16)
    tb = t2.astype(jnp.bfloat16)
    loss3 = jax.block_until_ready(dice_loss(xb, tb, min_pallas_elements=0))
    ref3 = jax.block_until_ready(_reference_dice_loss(xb, tb))
    assert jnp.allclose(loss3, ref3, atol=1e-4, rtol=1e-4), (loss3, ref3)

    print("KERNEL_OK")
</pallas_src>

<mosaic_0001>
module attributes {stable_mosaic.version = 11 : i64} {
  func.func @_dice_sums_kernel(%arg0: i32, %arg1: memref<16x128xf32, #tpu.memory_space<vmem>>, %arg2: memref<16x128xf32, #tpu.memory_space<vmem>>, %arg3: memref<3x8x128xf32, #tpu.memory_space<vmem>>) attributes {dimension_semantics = [#tpu.dimension_semantics<arbitrary>], iteration_bounds = array<i64: 1>, scalar_prefetch = 0 : i64, scratch_operands = 0 : i64, tpu.core_type = #tpu.core_type<tc>, window_params = [{transform_indices = @transform_0, window_bounds = array<i64: 16, 128>}, {transform_indices = @transform_1, window_bounds = array<i64: 16, 128>}, {pipeline_mode = #tpu.pipeline_mode<synchronous>, transform_indices = @transform_2, window_bounds = array<i64: 3, 8, 128>}]} {
    %c0_i32 = arith.constant 0 : i32
    %0 = arith.cmpi eq, %arg0, %c0_i32 : i32
    %1 = arith.extui %0 : i1 to i32
    %c0_i32_0 = arith.constant 0 : i32
    %2 = arith.cmpi ne, %1, %c0_i32_0 : i32
    scf.if %2 {
      %cst_22 = arith.constant 0.000000e+00 : f32
      %29 = vector.broadcast %cst_22 : f32 to vector<3x8x128xf32>
      %c0_23 = arith.constant 0 : index
      %c0_24 = arith.constant 0 : index
      %c0_25 = arith.constant 0 : index
      %30 = vector.load %arg3[%c0_23, %c0_24, %c0_25] : memref<3x8x128xf32, #tpu.memory_space<vmem>>, vector<3x8x128xf32>
      tpu.vector_store %arg3[%c0_23, %c0_24, %c0_25], %29 {strides = array<i32>} : memref<3x8x128xf32, #tpu.memory_space<vmem>>, vector<3x8x128xf32>,
    } else {
    }
    %c0 = arith.constant 0 : index
    %c0_1 = arith.constant 0 : index
    %3 = vector.load %arg1[%c0, %c0_1] : memref<16x128xf32, #tpu.memory_space<vmem>>, vector<16x128xf32>
    %c0_2 = arith.constant 0 : index
    %c0_3 = arith.constant 0 : index
    %4 = vector.load %arg2[%c0_2, %c0_3] : memref<16x128xf32, #tpu.memory_space<vmem>>, vector<16x128xf32>
    %5 = vector.shape_cast %3 : vector<16x128xf32> to vector<2x8x128xf32>
    %6 = vector.shape_cast %4 : vector<16x128xf32> to vector<2x8x128xf32>
    %c0_4 = arith.constant 0 : index
    %c0_5 = arith.constant 0 : index
    %c0_6 = arith.constant 0 : index
    %7 = vector.load %arg3[%c0_4, %c0_5, %c0_6] : memref<3x8x128xf32, #tpu.memory_space<vmem>>, vector<1x8x128xf32>
    %8 = vector.shape_cast %7 : vector<1x8x128xf32> to vector<8x128xf32>
    %9 = arith.mulf %5, %6 : vector<2x8x128xf32>
    %cst = arith.constant dense<0.000000e+00> : vector<8x128xf32>
    %10 = vector.multi_reduction <add>, %9, %cst [0] : vector<2x8x128xf32> to vector<8x128xf32>
    %11 = arith.addf %8, %10 : vector<8x128xf32>
    %c0_7 = arith.constant 0 : index
    %c0_8 = arith.constant 0 : index
    %c0_9 = arith.constant 0 : index
    %12 = vector.load %arg3[%c0_7, %c0_8, %c0_9] : memref<3x8x128xf32, #tpu.memory_space<vmem>>, vector<1x8x128xf32>
    %13 = vector.shape_cast %12 : vector<1x8x128xf32> to vector<8x128xf32>
    %14 = vector.shape_cast %11 : vector<8x128xf32> to vector<1x8x128xf32>
    tpu.vector_store %arg3[%c0_7, %c0_8, %c0_9], %14 {strides = array<i32>} : memref<3x8x128xf32, #tpu.memory_space<vmem>>, vector<1x8x128xf32>,
    %c1 = arith.constant 1 : index
    %c0_10 = arith.constant 0 : index
    %c0_11 = arith.constant 0 : index
    %15 = vector.load %arg3[%c1, %c0_10, %c0_11] : memref<3x8x128xf32, #tpu.memory_space<vmem>>, vector<1x8x128xf32>
    %16 = vector.shape_cast %15 : vector<1x8x128xf32> to vector<8x128xf32>
    %cst_12 = arith.constant dense<0.000000e+00> : vector<8x128xf32>
    %17 = vector.multi_reduction <add>, %5, %cst_12 [0] : vector<2x8x128xf32> to vector<8x128xf32>
    %18 = arith.addf %16, %17 : vector<8x128xf32>
    %c1_13 = arith.constant 1 : index
    %c0_14 = arith.constant 0 : index
    %c0_15 = arith.constant 0 : index
    %19 = vector.load %arg3[%c1_13, %c0_14, %c0_15] : memref<3x8x128xf32, #tpu.memory_space<vmem>>, vector<1x8x128xf32>
    %20 = vector.shape_cast %19 : vector<1x8x128xf32> to vector<8x128xf32>
    %21 = vector.shape_cast %18 : vector<8x128xf32> to vector<1x8x128xf32>
    tpu.vector_store %arg3[%c1_13, %c0_14, %c0_15], %21 {strides = array<i32>} : memref<3x8x128xf32, #tpu.memory_space<vmem>>, vector<1x8x128xf32>,
    %c2 = arith.constant 2 : index
    %c0_16 = arith.constant 0 : index
    %c0_17 = arith.constant 0 : index
    %22 = vector.load %arg3[%c2, %c0_16, %c0_17] : memref<3x8x128xf32, #tpu.memory_space<vmem>>, vector<1x8x128xf32>
    %23 = vector.shape_cast %22 : vector<1x8x128xf32> to vector<8x128xf32>
    %cst_18 = arith.constant dense<0.000000e+00> : vector<8x128xf32>
    %24 = vector.multi_reduction <add>, %6, %cst_18 [0] : vector<2x8x128xf32> to vector<8x128xf32>
    %25 = arith.addf %23, %24 : vector<8x128xf32>
    %c2_19 = arith.constant 2 : index
    %c0_20 = arith.constant 0 : index
    %c0_21 = arith.constant 0 : index
    %26 = vector.load %arg3[%c2_19, %c0_20, %c0_21] : memref<3x8x128xf32, #tpu.memory_space<vmem>>, vector<1x8x128xf32>
    %27 = vector.shape_cast %26 : vector<1x8x128xf32> to vector<8x128xf32>
    %28 = vector.shape_cast %25 : vector<8x128xf32> to vector<1x8x128xf32>
    tpu.vector_store %arg3[%c2_19, %c0_20, %c0_21], %28 {strides = array<i32>} : memref<3x8x128xf32, #tpu.memory_space<vmem>>, vector<1x8x128xf32>,
    return
  }
  func.func @transform_0(%arg0: i32) -> (i32, i32) {
    %c0_i32 = arith.constant 0 : i32
    %c0_i32_0 = arith.constant 0 : i32
    return %arg0, %c0_i32 : i32, i32
  }
  func.func @transform_1(%arg0: i32) -> (i32, i32) {
    %c0_i32 = arith.constant 0 : i32
    %c0_i32_0 = arith.constant 0 : i32
    return %arg0, %c0_i32 : i32, i32
  }
  func.func @transform_2(%arg0: i32) -> (i32, i32, i32) {
    %c0_i32 = arith.constant 0 : i32
    %c0_i32_0 = arith.constant 0 : i32
    %c0_i32_1 = arith.constant 0 : i32
    %c0_i32_2 = arith.constant 0 : i32
    return %c0_i32, %c0_i32_0, %c0_i32_1 : i32, i32, i32
  }
}

</mosaic_0001>

<llo_original>
// kernel: tpu_custom_call.1
$region0: #{tpu_custom_call.1}
  #allocation0 [shape = 'u32[]', space=smem, size = 0x4, offset = 0x4, fixed_abs, tag = 'smem constant byte address 0x4 - core index']
  #allocation1 [shape = 'u32[72,128]{1,0:T(1,128)}', space=vmem, size = 0x9000, scoped, tag = 'internal scratch']
  %s0 = inlined_call_operand.hbm [shape: f32[16,128], index: 0, kind: input, shape index: {}]
  %s1 = inlined_call_operand.hbm [shape: f32[16,128], index: 1, kind: input, shape index: {}]
  %s2 = inlined_call_operand.hbm [shape: f32[3,8,128], index: 2, kind: output, shape index: {}]
  %s3 = sld [smem:[#allocation0]]
  $region30: #{tpu_custom_call.1} parent=0
    _
  %s5 = ssub.s32 1, %s3
  %s6 = scalar_select 0, %s5, %s3
  $region1: #{tpu_custom_call.1} parent=0
    #allocation2 [shape = 'u8[8192]{0}', space=vmem, size = 0x2000, scoped, tag = 'input window, operand 0, single buffered']
    #allocation3 [shape = 's32[1]{0}', space=sflag, size = 0x4, scoped, tag = 'scoped memory for tpu_custom_call.1']
    #allocation4 [shape = 's32[1]{0}', space=sflag, size = 0x4, scoped, tag = 'scoped memory for tpu_custom_call.1']
    #allocation5 [shape = 'u8[8192]{0}', space=vmem, size = 0x2000, scoped, tag = 'input window, operand 1, single buffered']
    #allocation6 [shape = 's32[1]{0}', space=sflag, size = 0x4, scoped, tag = 'scoped memory for tpu_custom_call.1']
    #allocation7 [shape = 'u8[12288]{0}', space=vmem, size = 0x3000, scoped, tag = 'output window, operand 0, single buffered']
    %7 = vsyncpa [#allocation3], 0
    %8 = vsyncpa [#allocation6], 0
    %9 = vsyncpa [#allocation4], 0
    // Predicated region
    $region2: #{tpu_custom_call.1} parent=1 // pred_check
      _
    $region3: #{tpu_custom_call.1} parent=1 // pred_check_branch
      %11 = sbr.rel (0) target = $region5
    $region4: #{tpu_custom_call.1} parent=1 // pred_region
      %13 = vsyncadd [#allocation3], 0
      %s14 = sshll.u32 %s0, 4
      %s15 = int_to_ptr.hbm [resolvable:$true] %s14
      %s16 = sshll.u32 [#allocation2], 4
      %s17 = int_to_ptr.vmem [resolvable:$true] %s16
      %22 = dma.hbm_to_vmem [thread:$0]  %s15, 256, %s17, [#allocation3], 128, 128, 8
    $region5: #{tpu_custom_call.1} parent=1 // pred_fallthru
      _
    // Predicated region
    $region6: #{tpu_custom_call.1} parent=1 // pred_check
      _
    $region7: #{tpu_custom_call.1} parent=1 // pred_check_branch
      %24 = sbr.rel (0) target = $region9
    $region8: #{tpu_custom_call.1} parent=1 // pred_region
      %26 = vsyncadd [#allocation6], 0
      %s27 = sshll.u32 %s1, 4
      %s28 = int_to_ptr.hbm [resolvable:$true] %s27
      %s29 = sshll.u32 [#allocation5], 4
      %s30 = int_to_ptr.vmem [resolvable:$true] %s29
      %35 = dma.hbm_to_vmem [thread:$0]  %s28, 256, %s30, [#allocation6], 128, 128, 8
    $region9: #{tpu_custom_call.1} parent=1 // pred_fallthru
      _
    // Predicated region
    $region10: #{tpu_custom_call.1} parent=1 // pred_check
      _
    $region11: #{tpu_custom_call.1} parent=1 // pred_check_branch
      %37 = sbr.rel (0) target = $region13
    $region12: #{tpu_custom_call.1} parent=1 // pred_region
      %39 = dma.done [#allocation3], 256
    $region13: #{tpu_custom_call.1} parent=1 // pred_fallthru
      _
    // Predicated region
    $region14: #{tpu_custom_call.1} parent=1 // pred_check
      _
    $region15: #{tpu_custom_call.1} parent=1 // pred_check_branch
      %41 = sbr.rel (0) target = $region17
    $region16: #{tpu_custom_call.1} parent=1 // pred_region
      %43 = dma.done [#allocation6], 256
    $region17: #{tpu_custom_call.1} parent=1 // pred_fallthru
      _
    %p44 = scmp.eq.s32.totalorder 0, 0
    // Predicated region
    $region18: #{tpu_custom_call.1} parent=1 // pred_check
      %p45 = pneg %p44
    $region19: #{tpu_custom_call.1} parent=1 // pred_check_branch
      %47 = sbr.rel (%p45) target = $region21
    $region20: #{tpu_custom_call.1} parent=1 // pred_region
      %48 = vst [vmem:[#allocation7] sm:$0xff] 0.0
      %49 = vst [vmem:[#allocation7 + $0x8] sm:$0xff] 0.0
      %50 = vst [vmem:[#allocation7 + $0x10] sm:$0xff] 0.0
    $region21: #{tpu_custom_call.1} parent=1 // pred_fallthru
      _
    %v51 = vld [vmem:[#allocation2] sm:$0xff]
    %v52 = vld [vmem:[#allocation2 + $0x8] sm:$0xff]
    %v53 = vld [vmem:[#allocation5] sm:$0xff]
    %v54 = vld [vmem:[#allocation5 + $0x8] sm:$0xff]
    %v55 = vld [vmem:[#allocation7] sm:$0xff]
    %v56 = vmul.f32 %v51, %v53
    %v57 = vmul.f32 %v52, %v54
    %v58 = vadd.f32 %v56, %v57
    %v59 = vadd.f32 %v55, %v58
    %60 = vst [vmem:[#allocation7] sm:$0xff] %v59
    %s61 = scalar_lea.vmem [#allocation7], 8
    %v62 = vld [vmem:[%s61] sm:$0xff]
    %v63 = vadd.f32 %v51, %v52
    %v64 = vadd.f32 %v62, %v63
    %65 = vst [vmem:[%s61] sm:$0xff] %v64
    %s66 = scalar_lea.vmem [#allocation7], 16
    %v67 = vld [vmem:[%s66] sm:$0xff]
    %v68 = vadd.f32 %v53, %v54
    %v69 = vadd.f32 %v67, %v68
    %70 = vst [vmem:[%s66] sm:$0xff] %v69
    // Predicated region
    $region22: #{tpu_custom_call.1} parent=1 // pred_check
      _
    $region23: #{tpu_custom_call.1} parent=1 // pred_check_branch
      %72 = sbr.rel (0) target = $region25
    $region24: #{tpu_custom_call.1} parent=1 // pred_region
      %74 = vsyncadd [#allocation4], 0
      %s75 = sshll.u32 [#allocation7], 4
      %s76 = int_to_ptr.vmem [resolvable:$true] %s75
      %s77 = sshll.u32 %s2, 4
      %s78 = int_to_ptr.hbm [resolvable:$true] %s77
      %83 = dma.vmem_to_hbm [thread:$0]  %s76, 384, %s78, [#allocation4], 128, 128, 8
    $region25: #{tpu_custom_call.1} parent=1 // pred_fallthru
      _
    // Predicated region
    $region26: #{tpu_custom_call.1} parent=1 // pred_check
      _
    $region27: #{tpu_custom_call.1} parent=1 // pred_check_branch
      %85 = sbr.rel (0) target = $region29
    $region28: #{tpu_custom_call.1} parent=1 // pred_region
      %87 = dma.done [#allocation4], 384
    $region29: #{tpu_custom_call.1} parent=1 // pred_fallthru
      _
    %88 = vsyncpa [#allocation3], 1
    %89 = vsyncpa [#allocation6], 1
    %90 = vsyncpa [#allocation4], 1

</llo_original>
